<compile_context>
chip_gen: v7x
topology: tpu7x:2x2x1
jax: 0.10.0
libtpu: 0.0.40
codegen_flags: <defaults>
</compile_context>

<pallas_src>
import functools
import math

import jax
import jax.numpy as jnp
from jax.experimental import pallas as pl
from jax.experimental.pallas import tpu as pltpu


# ---------------------------------------------------------------------------
# Kernel 1: reparameterized weight sample + KL (runs once on the whole,
# small, weight tensor already in the GEMM layout (Cout, kh*kw*Cin)).
# ---------------------------------------------------------------------------
def _sample_kl_kernel(mu_ref, rho_ref, eps_ref, w_ref, kl_ref,
                      *, mu_prior, sigma_prior):
    mu = mu_ref[...]
    rho = rho_ref[...]
    eps = eps_ref[...]
    # rho -> std (softplus with the >=50 passthrough); clamp inside exp so the
    # untaken branch never overflows.
    std = jnp.where(rho < 50.0,
                    jnp.log1p(jnp.exp(jnp.minimum(rho, 50.0))),
                    rho)
    w = mu + std * eps
    w_ref[...] = w.astype(jnp.bfloat16)

    # KL = sum(logN(w|mu,std)) - sum(logN(w|mu_p,sp))
    #    = N*log(sp) - sum(log std) - 0.5*sum(eps^2) + sum((w-mu_p)^2)/(2 sp^2)
    # (uses w - mu == std*eps), fused into one expression + one reduction.
    n_w = mu_ref.shape[0] * mu_ref.shape[1]
    half_inv_sp2 = 0.5 / (sigma_prior * sigma_prior)
    elem = ((w - mu_prior) ** 2 * half_inv_sp2
            - jnp.log(std)
            - 0.5 * (eps * eps))
    kl_ref[0] = jnp.sum(elem) + float(n_w) * math.log(sigma_prior)


# ---------------------------------------------------------------------------
# Kernel 2: conv as one explicit GEMM tile on the MXU.
#   w_ref: (Cout, k_feat) bf16 resident sampled weight
#   p_ref: (k_feat, tp)   bf16 streamed pixel tile (pixels on lanes)
#   o_ref: (Cout, tp)     f32 lane-dense output tile
# ---------------------------------------------------------------------------
def _conv_gemm_kernel(w_ref, p_ref, o_ref):
    o_ref[...] = jax.lax.dot_general(
        w_ref[...], p_ref[...],
        dimension_numbers=(((1,), (0,)), ((), ())),
        preferred_element_type=jnp.float32)


def get_h_out(hin, p, d, k, s):
    return int((hin + 2 * p - d * (k - 1) - 1) / s + 1)


def conv_bnn_forward(x, weight_mu, weight_rho, eps, *, mu_prior, sigma_prior,
                     stride=1, padding=0, dilation=1, tile_pixels=512):
    """Returns (out, kl). out: (B, Cout, Hout, Wout) f32, kl: scalar f32."""
    b, c_in, h, w = x.shape
    c_out, c_in2, kh, kw = weight_mu.shape
    assert c_in2 == c_in
    assert weight_rho.shape == weight_mu.shape
    assert eps.shape == weight_mu.shape

    h_out = get_h_out(h, padding, dilation, kh, stride)
    w_out = get_h_out(w, padding, dilation, kw, stride)
    k_feat = kh * kw * c_in
    n_pix = b * h_out * w_out

    # ---- weight sample + KL (tiny, one shot) --------------------------------
    # GEMM layout (Cout, kh*kw*Cin) with feature order (i, j, ci).
    def to_gemm_layout(p):
        return jnp.transpose(p, (0, 2, 3, 1)).reshape(c_out, k_feat)

    mu_g = to_gemm_layout(weight_mu)
    rho_g = to_gemm_layout(weight_rho)
    eps_g = to_gemm_layout(eps)

    w_bf16, kl = pl.pallas_call(
        functools.partial(_sample_kl_kernel,
                          mu_prior=float(mu_prior),
                          sigma_prior=float(sigma_prior)),
        out_shape=(
            jax.ShapeDtypeStruct((c_out, k_feat), jnp.bfloat16),
            jax.ShapeDtypeStruct((1,), jnp.float32),
        ),
        in_specs=[pl.BlockSpec(memory_space=pltpu.MemorySpace.VMEM)] * 3,
        out_specs=(
            pl.BlockSpec(memory_space=pltpu.MemorySpace.VMEM),
            pl.BlockSpec(memory_space=pltpu.MemorySpace.SMEM),
        ),
    )(mu_g, rho_g, eps_g)

    # ---- im2col patch slab, bf16, features-minor / pixels-on-lanes ----------
    # Shape (k_feat, N_pix): lane axis = pixels (dense, tiled in multiples of
    # 128), sublane axis = features (== full array dim -> (8,128) rule holds).
    # TODO(synk): for large inputs, replace the im2col slab with an in-kernel
    # shifted-window accumulation (manual DMA of overlapping NHWC row windows)
    # to remove the kh*kw HBM read amplification.
    x_bf = x.astype(jnp.bfloat16)
    x_pad = jnp.pad(x_bf, ((0, 0), (0, 0),
                           (padding, padding), (padding, padding)))
    rows = []
    for i in range(kh):
        for j in range(kw):
            h0, w0 = i * dilation, j * dilation
            sl = x_pad[:, :,
                       h0:h0 + (h_out - 1) * stride + 1:stride,
                       w0:w0 + (w_out - 1) * stride + 1:stride]
            rows.append(jnp.moveaxis(sl, 1, 0).reshape(c_in, n_pix))
    patches = jnp.concatenate(rows, axis=0)            # (k_feat, n_pix) bf16

    # Pad the pixel (lane) axis to a multiple of the pixel tile.
    tp = int(tile_pixels)
    assert tp % 128 == 0, "tile_pixels must be a multiple of 128 (lane width)"
    n_tiles = (n_pix + tp - 1) // tp
    n_pad = n_tiles * tp
    if n_pad != n_pix:
        patches = jnp.pad(patches, ((0, 0), (0, n_pad - n_pix)))

    # ---- VMEM budget (everything double-buffered) + explicit scoped limit ---
    #   2 x (k_feat, tp) bf16 patches + 2 x (Cout, tp) f32 out
    # + 2 x (Cout, k_feat) bf16 resident weight.
    # Re-derive before scaling channels / tile_pixels: v7x has 64 MiB physical
    # (32 MiB scoped default), v5e's scoped default is 16 MiB.
    vmem_need = 2 * (k_feat * tp * 2 + c_out * tp * 4 + c_out * k_feat * 2)
    vmem_limit = int(min(max(4 * vmem_need, 16 << 20), 48 << 20))

    # TODO(synk): for Cout >= 256, add a second "parallel" grid axis tiling
    # Cout in multiples of 128 so weight/output tiles stay bounded in VMEM.
    out_flat = pl.pallas_call(
        _conv_gemm_kernel,
        out_shape=jax.ShapeDtypeStruct((c_out, n_pad), jnp.float32),
        grid=(n_tiles,),
        in_specs=[
            pl.BlockSpec((c_out, k_feat), lambda i: (0, 0)),   # sampled w
            pl.BlockSpec((k_feat, tp), lambda i: (0, i)),      # pixel tiles
        ],
        out_specs=pl.BlockSpec((c_out, tp), lambda i: (0, i)),
        compiler_params=pltpu.CompilerParams(
            dimension_semantics=("parallel",),
            vmem_limit_bytes=vmem_limit),
    )(w_bf16, patches)

    # (Cout, N_pix) -> NCHW.
    # TODO(synk): keep NHWC / bf16 output if the consumer tolerates it (saves
    # an extra full-tensor HBM round trip and half the writeback bytes).
    out = out_flat[:, :n_pix].reshape(c_out, b, h_out, w_out)
    out = jnp.transpose(out, (1, 0, 2, 3))
    return out, kl[0]


def init_parameter(init_value, init_type, size, key=None):
    """Mirror of LayerBnn.init_parameter."""
    if init_type == "fixed":
        return jnp.ones(size, dtype=jnp.float32) * init_value
    elif init_type == "normal":
        assert key is not None
        return init_value + 0.01 * jax.random.normal(key, size, dtype=jnp.float32)
    else:
        raise ValueError("To implement")


# TODO(synk): bias=True path (sampled bias + its KL term) not implemented;
# the module default is bias=False.

if __name__ == "__main__":
    # Module config.
    in_size, out_size = 4, 8          # channels
    h = w = 16
    batch = 2
    kernel_size = 3
    stride, padding, dilation = 1, 1, 1
    init_rho_post, init_mu_post = -3.0, 0.0
    sigma_prior, mu_prior = 1.0, 0.0

    # Deterministic parameter init (init_type='fixed').
    weight_mu = init_parameter(init_mu_post, "fixed",
                               (out_size, in_size, kernel_size, kernel_size))
    weight_rho = init_parameter(init_rho_post, "fixed",
                                (out_size, in_size, kernel_size, kernel_size))

    # Deterministic inputs and reparameterization noise.
    key = jax.random.PRNGKey(0)
    kx, keps = jax.random.split(key)
    x = jax.random.normal(kx, (batch, in_size, h, w), dtype=jnp.float32)
    eps = jax.random.normal(keps, weight_mu.shape, dtype=jnp.float32)

    out, kl = conv_bnn_forward(
        x, weight_mu, weight_rho, eps,
        mu_prior=mu_prior, sigma_prior=sigma_prior,
        stride=stride, padding=padding, dilation=dilation)
    jax.block_until_ready((out, kl))

    # ---- pure-JAX reference (mirrors the PyTorch forward) -------------------
    std_ref = jnp.where(weight_rho < 50.0, jnp.log1p(jnp.exp(weight_rho)),
                        weight_rho)
    w_ref = weight_mu + std_ref * eps
    lvp = jnp.sum(-0.5 * jnp.log(2 * jnp.pi * std_ref ** 2)
                  - (w_ref - weight_mu) ** 2 / (2 * std_ref ** 2))
    lpr = jnp.sum(-0.5 * jnp.log(2 * jnp.pi * sigma_prior ** 2)
                  - (w_ref - mu_prior) ** 2 / (2 * sigma_prior ** 2))
    kl_ref = lvp - lpr

    # bf16-consistent conv reference (the kernel feeds the MXU bf16 inputs with
    # f32 accumulation; mirror that so the comparison is tight).
    x_bf_ref = x.astype(jnp.bfloat16).astype(jnp.float32)
    w_bf_ref = w_ref.astype(jnp.bfloat16).astype(jnp.float32)
    out_ref = jax.lax.conv_general_dilated(
        x_bf_ref, w_bf_ref,
        window_strides=(stride, stride),
        padding=[(padding, padding), (padding, padding)],
        rhs_dilation=(dilation, dilation),
        dimension_numbers=("NCHW", "OIHW", "NCHW"),
        precision=jax.lax.Precision.HIGHEST)

    h_o = get_h_out(h, padding, dilation, kernel_size, stride)
    w_o = get_h_out(w, padding, dilation, kernel_size, stride)
    assert out.shape == (batch, out_size, h_o, w_o)
    assert jnp.allclose(out, out_ref, atol=5e-3, rtol=1e-2)
    assert jnp.allclose(kl, kl_ref, atol=0.5, rtol=1e-3)

    print("KERNEL_OK")
</pallas_src>

<mosaic_0001>
module attributes {stable_mosaic.version = 11 : i64} {
  func.func @_sample_kl_kernel(%arg0: memref<8x36xf32, #tpu.memory_space<vmem>>, %arg1: memref<8x36xf32, #tpu.memory_space<vmem>>, %arg2: memref<8x36xf32, #tpu.memory_space<vmem>>, %arg3: memref<8x36xbf16, #tpu.memory_space<vmem>>, %arg4: memref<1xf32, #tpu.memory_space<smem>>) attributes {dimension_semantics = [], scalar_prefetch = 0 : i64, scratch_operands = 0 : i64, tpu.core_type = #tpu.core_type<tc>} {
    %c0 = arith.constant 0 : index
    %c0_0 = arith.constant 0 : index
    %0 = vector.load %arg0[%c0, %c0_0] : memref<8x36xf32, #tpu.memory_space<vmem>>, vector<8x36xf32>
    %c0_1 = arith.constant 0 : index
    %c0_2 = arith.constant 0 : index
    %1 = vector.load %arg1[%c0_1, %c0_2] : memref<8x36xf32, #tpu.memory_space<vmem>>, vector<8x36xf32>
    %c0_3 = arith.constant 0 : index
    %c0_4 = arith.constant 0 : index
    %2 = vector.load %arg2[%c0_3, %c0_4] : memref<8x36xf32, #tpu.memory_space<vmem>>, vector<8x36xf32>
    %cst = arith.constant 5.000000e+01 : f32
    %3 = vector.broadcast %cst : f32 to vector<8x36xf32>
    %4 = arith.cmpf olt, %1, %3 : vector<8x36xf32>
    %cst_5 = arith.constant 5.000000e+01 : f32
    %5 = vector.broadcast %cst_5 : f32 to vector<8x36xf32>
    %6 = arith.minimumf %1, %5 : vector<8x36xf32>
    %7 = math.exp %6 : vector<8x36xf32>
    %8 = math.log1p %7 : vector<8x36xf32>
    %9 = arith.select %4, %8, %1 : vector<8x36xi1>, vector<8x36xf32>
    %10 = arith.mulf %9, %2 : vector<8x36xf32>
    %11 = arith.addf %0, %10 : vector<8x36xf32>
    %12 = arith.truncf %11 : vector<8x36xf32> to vector<8x36xbf16>
    %c0_6 = arith.constant 0 : index
    %c0_7 = arith.constant 0 : index
    %13 = vector.load %arg3[%c0_6, %c0_7] : memref<8x36xbf16, #tpu.memory_space<vmem>>, vector<8x36xbf16>
    tpu.vector_store %arg3[%c0_6, %c0_7], %12 {strides = array<i32>} : memref<8x36xbf16, #tpu.memory_space<vmem>>, vector<8x36xbf16>,
    %cst_8 = arith.constant 0.000000e+00 : f32
    %14 = vector.broadcast %cst_8 : f32 to vector<8x36xf32>
    %15 = arith.subf %11, %14 : vector<8x36xf32>
    %16 = arith.mulf %15, %15 : vector<8x36xf32>
    %cst_9 = arith.constant 5.000000e-01 : f32
    %17 = vector.broadcast %cst_9 : f32 to vector<8x36xf32>
    %18 = arith.mulf %16, %17 : vector<8x36xf32>
    %19 = math.log %9 : vector<8x36xf32>
    %20 = arith.subf %18, %19 : vector<8x36xf32>
    %21 = arith.mulf %2, %2 : vector<8x36xf32>
    %cst_10 = arith.constant 5.000000e-01 : f32
    %22 = vector.broadcast %cst_10 : f32 to vector<8x36xf32>
    %23 = arith.mulf %22, %21 : vector<8x36xf32>
    %24 = arith.subf %20, %23 : vector<8x36xf32>
    %25 = vector.shape_cast %24 : vector<8x36xf32> to vector<1x8x36xf32>
    %cst_11 = arith.constant dense<0.000000e+00> : vector<1xf32>
    %26 = vector.multi_reduction <add>, %25, %cst_11 [1, 2] : vector<1x8x36xf32> to vector<1xf32>
    %27 = vector.shape_cast %26 : vector<1xf32> to vector<1x1x1xf32>
    %28 = vector.extract %27[0, 0, 0] : f32 from vector<1x1x1xf32>
    %cst_12 = arith.constant 0.000000e+00 : f32
    %29 = arith.addf %28, %cst_12 : f32
    %c0_13 = arith.constant 0 : index
    %30 = memref.load %arg4[%c0_13] : memref<1xf32, #tpu.memory_space<smem>>
    memref.store %29, %arg4[%c0_13] : memref<1xf32, #tpu.memory_space<smem>>
    return
  }
}

</mosaic_0001>

<llo_original>
// kernel: tpu_custom_call.1
$region0: #{tpu_custom_call.1}
  #allocation0 [shape = 'u32[]', space=smem, size = 0x4, offset = 0x4, fixed_abs, tag = 'smem constant byte address 0x4 - core index']
  #allocation1 [shape = 'u32[144,128]{1,0:T(1,128)}', space=vmem, size = 0x12000, scoped, tag = 'internal scratch']
  %s0 = inlined_call_operand.hbm [shape: f32[8,36], index: 0, kind: input, shape index: {}]
  %s1 = inlined_call_operand.hbm [shape: f32[8,36], index: 1, kind: input, shape index: {}]
  %s2 = inlined_call_operand.hbm [shape: f32[8,36], index: 2, kind: input, shape index: {}]
  %s3 = inlined_call_operand.hbm [shape: bf16[8,36], index: 3, kind: output, shape index: {0}]
  %s4 = inlined_call_operand.hbm [shape: f32[1], index: 4, kind: output, shape index: {1}]
  %5 = xla_tuple %s3, %s4
  %s6 = sld [smem:[#allocation0]]
  $region42: #{tpu_custom_call.1} parent=0
    _
  %s8 = ssub.s32 1, %s6
  %s9 = scalar_select 0, %s8, %s6
  $region1: #{tpu_custom_call.1} parent=0
    #allocation2 [shape = 'u8[4096]{0}', space=vmem, size = 0x1000, scoped, tag = 'input window, operand 0, single buffered']
    #allocation3 [shape = 's32[1]{0}', space=sflag, size = 0x4, scoped, tag = 'scoped memory for tpu_custom_call.1']
    #allocation4 [shape = 's32[1]{0}', space=sflag, size = 0x4, scoped, tag = 'scoped memory for tpu_custom_call.1']
    #allocation5 [shape = 's32[1]{0}', space=sflag, size = 0x4, scoped, tag = 'scoped memory for tpu_custom_call.1']
    #allocation6 [shape = 'u8[4096]{0}', space=vmem, size = 0x1000, scoped, tag = 'input window, operand 1, single buffered']
    #allocation7 [shape = 's32[1]{0}', space=sflag, size = 0x4, scoped, tag = 'scoped memory for tpu_custom_call.1']
    #allocation8 [shape = 'u8[4096]{0}', space=vmem, size = 0x1000, scoped, tag = 'input window, operand 2, single buffered']
    #allocation9 [shape = 'u8[2048]{0}', space=vmem, size = 0x800, scoped, tag = 'output window, operand 0, single buffered']
    #allocation10 [shape = 'u8[512]{0}', space=smem, size = 0x200, scoped, tag = 'output window, operand 1, single buffered']
    %10 = vsyncpa [#allocation3], 0
    %11 = vsyncpa [#allocation7], 0
    %12 = vsyncpa [#allocation4], 0
    %13 = vsyncpa [#allocation5], 0
    // Predicated region
    $region2: #{tpu_custom_call.1} parent=1 // pred_check
      _
    $region3: #{tpu_custom_call.1} parent=1 // pred_check_branch
      %15 = sbr.rel (0) target = $region5
    $region4: #{tpu_custom_call.1} parent=1 // pred_region
      %s17 = ssub.s32 128, 128
      %18 = vsyncadd [#allocation3], %s17
      %s20 = sshll.u32 [#allocation2], 4
      %s21 = int_to_ptr.vmem [resolvable:$true] %s20
      %23 = dma.hbm_to_vmem [thread:$0]  %s0, 128, %s21, [#allocation3]
    $region5: #{tpu_custom_call.1} parent=1 // pred_fallthru
      _
    // Predicated region
    $region6: #{tpu_custom_call.1} parent=1 // pred_check
      _
    $region7: #{tpu_custom_call.1} parent=1 // pred_check_branch
      %25 = sbr.rel (0) target = $region9
    $region8: #{tpu_custom_call.1} parent=1 // pred_region
      %s27 = ssub.s32 128, 128
      %28 = vsyncadd [#allocation7], %s27
      %s30 = sshll.u32 [#allocation6], 4
      %s31 = int_to_ptr.vmem [resolvable:$true] %s30
      %33 = dma.hbm_to_vmem [thread:$0]  %s1, 128, %s31, [#allocation7]
    $region9: #{tpu_custom_call.1} parent=1 // pred_fallthru
      _
    // Predicated region
    $region10: #{tpu_custom_call.1} parent=1 // pred_check
      _
    $region11: #{tpu_custom_call.1} parent=1 // pred_check_branch
      %35 = sbr.rel (0) target = $region13
    $region12: #{tpu_custom_call.1} parent=1 // pred_region
      %s37 = ssub.s32 128, 128
      %38 = vsyncadd [#allocation7], %s37
      %s40 = sshll.u32 [#allocation8], 4
      %s41 = int_to_ptr.vmem [resolvable:$true] %s40
      %43 = dma.hbm_to_vmem [thread:$0]  %s2, 128, %s41, [#allocation7]
    $region13: #{tpu_custom_call.1} parent=1 // pred_fallthru
      _
    // Predicated region
    $region14: #{tpu_custom_call.1} parent=1 // pred_check
      _
    $region15: #{tpu_custom_call.1} parent=1 // pred_check_branch
      %45 = sbr.rel (0) target = $region17
    $region16: #{tpu_custom_call.1} parent=1 // pred_region
      %46 = dma.done [#allocation3], 128
    $region17: #{tpu_custom_call.1} parent=1 // pred_fallthru
      _
    // Predicated region
    $region18: #{tpu_custom_call.1} parent=1 // pred_check
      _
    $region19: #{tpu_custom_call.1} parent=1 // pred_check_branch
      %48 = sbr.rel (0) target = $region21
    $region20: #{tpu_custom_call.1} parent=1 // pred_region
      %49 = dma.done [#allocation7], 128
    $region21: #{tpu_custom_call.1} parent=1 // pred_fallthru
      _
    // Predicated region
    $region22: #{tpu_custom_call.1} parent=1 // pred_check
      _
    $region23: #{tpu_custom_call.1} parent=1 // pred_check_branch
      %51 = sbr.rel (0) target = $region25
    $region24: #{tpu_custom_call.1} parent=1 // pred_region
      %52 = dma.done [#allocation7], 128
    $region25: #{tpu_custom_call.1} parent=1 // pred_fallthru
      _
    %v53 = vld [vmem:[#allocation2] sm:$0xff]
    %v54 = vld [vmem:[#allocation6] sm:$0xff]
    %v55 = vld [vmem:[#allocation8] sm:$0xff]
    %vm56 = vcmp.lt.f32.partialorder %v54, 50.0
    %v57 = vmin.f32 %v54, 50.0
    %v58 = vmul.f32 %v57, 1.442695
    %v59 = vpow.pop %v58
    %v60 = vadd.f32 %v59, 1.0
    %v61 = vlog2.pop %v60
    %v62 = vmul.f32 %v61, 0.6931472
    %v63 = vmul.f32 -0.5, %v59
    %v64 = vadd.f32 %v63, 1.0
    %v65 = vmul.f32 %v64, %v59
    %v66 = vand.u32 2147483647, %v59
    %vm67 = vcmp.lt.f32.partialorder %v66, 0.0004427343
    %v68 = vsel %vm67, %v65, %v62
    %v69 = vsel %vm56, %v68, %v54
    %v70 = vmul.f32 %v69, %v55
    %v71 = vadd.f32 %v53, %v70
    %v72 = vpack.c.bf16 %v71, %v71
    %vm73 = vcmask 289792
    %74 = vst.msk [vmem:[#allocation9] sm:$0xf] %vm73, %v72
    %v75 = vmul.f32 %v71, %v71
    %v76 = vmul.f32 %v75, 0.5
    %v77 = vlog2.pop %v69
    %v78 = vmul.f32 %v77, 0.6931472
    %v79 = vsub.f32 %v76, %v78
    %v80 = vmul.f32 %v55, %v55
    %v81 = vmul.f32 %v80, 0.5
    %v82 = vsub.f32 %v79, %v81
    %vm83 = vcmask 293888
    %v84 = vsel %vm83, %v82, 0.0
    %85 = vadd.xlane.f32.xlu0 %v84
    %v86 = vpop.xlane.xlu0 %85
    %v87 = vrot.slane %v86, 4
    %v88 = vadd.f32 %v86, %v87
    %v89 = vrot.slane %v88, 2
    %v90 = vadd.f32 %v88, %v89
    %v91 = vrot.slane %v90, 1
    %v92 = vadd.f32 %v90, %v91
    %s93 = vtos %v92
    %s94 = sadd.f32 %s93, 0.0
    %s95 = scalar_lea.smem [#allocation10], 0
    %96 = sst [smem:[%s95]] %s94
    // Predicated region
    $region26: #{tpu_custom_call.1} parent=1 // pred_check
      _
    $region27: #{tpu_custom_call.1} parent=1 // pred_check_branch
      %98 = sbr.rel (0) target = $region29
    $region28: #{tpu_custom_call.1} parent=1 // pred_region
      %s100 = ssub.s32 64, 64
      %101 = vsyncadd [#allocation4], %s100
      %s103 = sshll.u32 [#allocation9], 4
      %s104 = int_to_ptr.vmem [resolvable:$true] %s103
      %106 = dma.vmem_to_hbm [thread:$0]  %s104, 64, %s3, [#allocation4]
    $region29: #{tpu_custom_call.1} parent=1 // pred_fallthru
      _
    // Predicated region
    $region30: #{tpu_custom_call.1} parent=1 // pred_check
      _
    $region31: #{tpu_custom_call.1} parent=1 // pred_check_branch
      %108 = sbr.rel (0) target = $region33
    $region32: #{tpu_custom_call.1} parent=1 // pred_region
      %s110 = ssub.s32 16, 16
      %111 = vsyncadd [#allocation5], %s110
      %114 = dma.smem_to_hbm [#allocation10], 16, %s4, [#allocation5]
    $region33: #{tpu_custom_call.1} parent=1 // pred_fallthru
      _
    // Predicated region
    $region34: #{tpu_custom_call.1} parent=1 // pred_check
      _
    $region35: #{tpu_custom_call.1} parent=1 // pred_check_branch
      %116 = sbr.rel (0) target = $region37
    $region36: #{tpu_custom_call.1} parent=1 // pred_region
      %117 = dma.done [#allocation4], 64
    $region37: #{tpu_custom_call.1} parent=1 // pred_fallthru
      _
    // Predicated region
    $region38: #{tpu_custom_call.1} parent=1 // pred_check
      _
    $region39: #{tpu_custom_call.1} parent=1 // pred_check_branch
      %119 = sbr.rel (0) target = $region41
    $region40: #{tpu_custom_call.1} parent=1 // pred_region
      %120 = dma.done [#allocation5], 16
    $region41: #{tpu_custom_call.1} parent=1 // pred_fallthru
      _
    %121 = sfence
    %122 = vsyncpa [#allocation3], 1
    %123 = vsyncpa [#allocation7], 1
    %124 = vsyncpa [#allocation4], 1
    %125 = vsyncpa [#allocation5], 1

</llo_original>
